<compile_context>
chip_gen: v5e
topology: v5e:2x2
jax: 0.10.0
libtpu: 0.0.40
codegen_flags: <defaults>
</compile_context>

<pallas_src>
import functools

import jax
import jax.numpy as jnp
from jax import lax
from jax.experimental import pallas as pl
from jax.experimental.pallas import tpu as pltpu


def _gather_points_kernel(idx_ref, x_ref, o_ref, *, precision):
    """One grid step: fold one N tile of xyz into the resident output block.

    idx_ref: (1, 1, tp)  int32   gathered-point indices for this npoint block
    x_ref:   (1, C, tn)  x-dtype channels-major xyz tile (N tile `n`)
    o_ref:   (1, C, tp)  float32 output block, resident across the N axis
    """
    n_i = pl.program_id(2)
    tn = x_ref.shape[2]

    @pl.when(n_i == 0)
    def _():
        o_ref[...] = jnp.zeros_like(o_ref)

    # Selection matrix for this N tile, built from a (tn, 1) column iota
    # broadcast against the (1, tp) index row: onehot[n, i] = (n_global == idx[i]).
    rows = n_i * tn + lax.broadcasted_iota(jnp.int32, (tn, 1), 0)   # (tn, 1)
    onehot = (rows == idx_ref[0]).astype(x_ref.dtype)               # (tn, tp)

    # Gather == matmul against the one-hot selection matrix; accumulate
    # directly into the resident f32 output block (no scratch, no epilogue).
    o_ref[0] += jnp.dot(x_ref[0], onehot,
                        preferred_element_type=jnp.float32,
                        precision=precision)


def _round_up(x, m):
    return ((x + m - 1) // m) * m


def gather_points(xyz, point_indices, *,
                  max_n_tile=1024,
                  onehot_budget_bytes=12 * 1024 * 1024,
                  vmem_limit_bytes=32 * 1024 * 1024):
    """out[b, i, c] = xyz[b, point_indices[b, i], c]  (matches GatherPoints.forward).

    Per-generation tuning knobs: on v5e prefer max_n_tile=512 / smaller budget
    (single vst slot, 16 MiB default scoped VMEM); on v6e/v7x the defaults are
    already within the 32 MiB scoped limit.
    """
    B, N, C = xyz.shape
    _, npoint = point_indices.shape

    # dtype / precision policy: bf16 one-hot + default MXU precision when the
    # inputs are bf16 (0/1 exact in bf16); f32 keeps HIGHEST for exactness.
    if xyz.dtype == jnp.bfloat16:
        x_dtype, precision = jnp.bfloat16, None
    else:
        x_dtype, precision = jnp.float32, lax.Precision.HIGHEST
    itemsize = jnp.dtype(x_dtype).itemsize

    # npoint (output / lane) blocking: keep the FULL padded npoint resident so
    # xyz is streamed from HBM exactly once.  If B == 1, split npoint into two
    # halves so both TensorCores get work on v7x (total work is unchanged).
    p_pad = _round_up(npoint, 128)
    p_splits = 2 if (B == 1 and p_pad % 256 == 0) else 1
    tp = p_pad // p_splits

    # N (reduction) tile: largest multiple of 128 whose (tn, tp) selection
    # temporaries (~mask + one-hot + slack) fit the per-step VMEM budget.
    per_row = 3 * tp * itemsize
    tn = (onehot_budget_bytes // per_row) // 128 * 128
    tn = int(max(128, min(tn, max_n_tile, _round_up(N, 128))))
    n_pad = _round_up(N, tn)

    # Lane-dense layout plumbing + zero padding (wrapper-side, not in-kernel).
    x_cn = jnp.transpose(xyz, (0, 2, 1)).astype(x_dtype)          # (B, C, N)
    x_cn = jnp.pad(x_cn, ((0, 0), (0, 0), (0, n_pad - N)))        # (B, C, n_pad)
    idx = jnp.clip(point_indices.astype(jnp.int32), 0, N - 1)     # no VMEM bounds check
    idx = jnp.pad(idx, ((0, 0), (0, p_pad - npoint)))             # padded idx -> column 0
    idx3 = idx.reshape(B, 1, p_pad)

    grid = (B, p_splits, n_pad // tn)

    cost = pl.CostEstimate(
        flops=2 * B * C * n_pad * p_pad        # one-hot matmul MACs
              + 2 * B * n_pad * p_pad,         # selection-matrix build (compare + cast)
        transcendentals=0,
        bytes_accessed=(B * C * n_pad * itemsize * p_splits   # xyz streamed once (x p_splits)
                        + B * p_pad * 4                       # indices
                        + B * C * p_pad * 4),                 # output
    )

    out_cn = pl.pallas_call(
        functools.partial(_gather_points_kernel, precision=precision),
        out_shape=jax.ShapeDtypeStruct((B, C, p_pad), jnp.float32),
        grid_spec=pltpu.PrefetchScalarGridSpec(
            num_scalar_prefetch=0,
            grid=grid,
            in_specs=[
                pl.BlockSpec((1, 1, tp), lambda b, p, n: (b, 0, p)),   # indices
                pl.BlockSpec((1, C, tn), lambda b, p, n: (b, 0, n)),   # xyz (C-major)
            ],
            out_specs=pl.BlockSpec((1, C, tp), lambda b, p, n: (b, 0, p)),
        ),
        compiler_params=pltpu.CompilerParams(
            dimension_semantics=("parallel", "parallel", "arbitrary"),
            vmem_limit_bytes=vmem_limit_bytes,
        ),
        cost_estimate=cost,
    )(idx3, x_cn)

    # Drop npoint padding, back to the module's (B, npoint, C) output layout.
    out = out_cn[:, :, :npoint]
    return jnp.transpose(out, (0, 2, 1)).astype(xyz.dtype)


if __name__ == "__main__":
    key = jax.random.PRNGKey(0)
    k_xyz, k_idx = jax.random.split(key)

    B, N, C = 2, 64, 3
    npoint = 16

    xyz = jax.random.normal(k_xyz, (B, N, C), dtype=jnp.float32)
    point_indices = jax.random.randint(k_idx, (B, npoint), 0, N, dtype=jnp.int32)

    out = gather_points(xyz, point_indices)
    out = jax.block_until_ready(out)

    # pure-JAX reference
    ref = jnp.take_along_axis(xyz, point_indices[..., None], axis=1)
    assert out.shape == (B, npoint, C), out.shape
    assert jnp.allclose(out, ref), "mismatch vs reference gather"

    print("KERNEL_OK")
</pallas_src>

<mosaic_0001>
module attributes {stable_mosaic.version = 11 : i64} {
  func.func @_gather_points_kernel(%arg0: i32, %arg1: i32, %arg2: i32, %arg3: memref<1x1x128xi32, #tpu.memory_space<vmem>>, %arg4: memref<1x3x128xf32, #tpu.memory_space<vmem>>, %arg5: memref<1x3x128xf32, #tpu.memory_space<vmem>>) attributes {dimension_semantics = [#tpu.dimension_semantics<parallel>, #tpu.dimension_semantics<parallel>, #tpu.dimension_semantics<arbitrary>], iteration_bounds = array<i64: 2, 1, 1>, scalar_prefetch = 0 : i64, scratch_operands = 0 : i64, tpu.core_type = #tpu.core_type<tc>, window_params = [{transform_indices = @transform_0, window_bounds = array<i64: 1, 1, 128>}, {transform_indices = @transform_1, window_bounds = array<i64: 1, 3, 128>}, {transform_indices = @transform_2, window_bounds = array<i64: 1, 3, 128>}]} {
    %c0_i32 = arith.constant 0 : i32
    %0 = arith.cmpi eq, %arg2, %c0_i32 : i32
    %1 = arith.extui %0 : i1 to i32
    %c0_i32_0 = arith.constant 0 : i32
    %2 = arith.cmpi ne, %1, %c0_i32_0 : i32
    scf.if %2 {
      %cst_12 = arith.constant 0.000000e+00 : f32
      %23 = vector.broadcast %cst_12 : f32 to vector<1x3x128xf32>
      %c0_13 = arith.constant 0 : index
      %c0_14 = arith.constant 0 : index
      %c0_15 = arith.constant 0 : index
      %24 = vector.load %arg5[%c0_13, %c0_14, %c0_15] : memref<1x3x128xf32, #tpu.memory_space<vmem>>, vector<1x3x128xf32>
      tpu.vector_store %arg5[%c0_13, %c0_14, %c0_15], %23 {strides = array<i32>} : memref<1x3x128xf32, #tpu.memory_space<vmem>>, vector<1x3x128xf32>,
    } else {
    }
    %c128_i32 = arith.constant 128 : i32
    %3 = arith.muli %arg2, %c128_i32 : i32
    %4 = tpu.iota {dimensions = array<i32: 0>} : vector<128x1xi32>
    %5 = vector.broadcast %3 : i32 to vector<128x1xi32>
    %6 = arith.addi %5, %4 : vector<128x1xi32>
    %c0 = arith.constant 0 : index
    %c0_1 = arith.constant 0 : index
    %c0_2 = arith.constant 0 : index
    %7 = vector.load %arg3[%c0, %c0_1, %c0_2] : memref<1x1x128xi32, #tpu.memory_space<vmem>>, vector<1x1x128xi32>
    %8 = vector.shape_cast %7 : vector<1x1x128xi32> to vector<1x128xi32>
    %9 = vector.broadcast %6 : vector<128x1xi32> to vector<128x128xi32>
    %10 = vector.broadcast %8 : vector<1x128xi32> to vector<128x128xi32>
    %11 = arith.cmpi eq, %9, %10 : vector<128x128xi32>
    %12 = arith.extui %11 : vector<128x128xi1> to vector<128x128xi32>
    %13 = arith.sitofp %12 : vector<128x128xi32> to vector<128x128xf32>
    %c0_3 = arith.constant 0 : index
    %c0_4 = arith.constant 0 : index
    %c0_5 = arith.constant 0 : index
    %14 = vector.load %arg5[%c0_3, %c0_4, %c0_5] : memref<1x3x128xf32, #tpu.memory_space<vmem>>, vector<1x3x128xf32>
    %15 = vector.shape_cast %14 : vector<1x3x128xf32> to vector<3x128xf32>
    %c0_6 = arith.constant 0 : index
    %c0_7 = arith.constant 0 : index
    %c0_8 = arith.constant 0 : index
    %16 = vector.load %arg4[%c0_6, %c0_7, %c0_8] : memref<1x3x128xf32, #tpu.memory_space<vmem>>, vector<1x3x128xf32>
    %17 = vector.shape_cast %16 : vector<1x3x128xf32> to vector<3x128xf32>
    %cst = arith.constant dense<0.000000e+00> : vector<3x128xf32>
    %18 = tpu.matmul %17, %13, %cst {dimension_numbers = #tpu.dot_dimension_numbers<[1], [0], [0], [1], [0, 0, 1, 1], [], []>, precision = #tpu.contract_precision<fp32>} : vector<3x128xf32>, vector<128x128xf32>, vector<3x128xf32> -> vector<3x128xf32>
    %19 = arith.addf %15, %18 : vector<3x128xf32>
    %c0_9 = arith.constant 0 : index
    %c0_10 = arith.constant 0 : index
    %c0_11 = arith.constant 0 : index
    %20 = vector.load %arg5[%c0_9, %c0_10, %c0_11] : memref<1x3x128xf32, #tpu.memory_space<vmem>>, vector<1x3x128xf32>
    %21 = vector.shape_cast %20 : vector<1x3x128xf32> to vector<3x128xf32>
    %22 = vector.shape_cast %19 : vector<3x128xf32> to vector<1x3x128xf32>
    tpu.vector_store %arg5[%c0_9, %c0_10, %c0_11], %22 {strides = array<i32>} : memref<1x3x128xf32, #tpu.memory_space<vmem>>, vector<1x3x128xf32>,
    return
  }
  func.func @transform_0(%arg0: i32, %arg1: i32, %arg2: i32) -> (i32, i32, i32) {
    %c0_i32 = arith.constant 0 : i32
    %c0_i32_0 = arith.constant 0 : i32
    return %arg0, %c0_i32, %arg1 : i32, i32, i32
  }
  func.func @transform_1(%arg0: i32, %arg1: i32, %arg2: i32) -> (i32, i32, i32) {
    %c0_i32 = arith.constant 0 : i32
    %c0_i32_0 = arith.constant 0 : i32
    return %arg0, %c0_i32, %arg2 : i32, i32, i32
  }
  func.func @transform_2(%arg0: i32, %arg1: i32, %arg2: i32) -> (i32, i32, i32) {
    %c0_i32 = arith.constant 0 : i32
    %c0_i32_0 = arith.constant 0 : i32
    return %arg0, %c0_i32, %arg1 : i32, i32, i32
  }
}

</mosaic_0001>

<llo_original>
// kernel: tpu_custom_call.1
$region0: #{tpu_custom_call.1}
  #allocation0 [shape = 'u32[]', space=smem, size = 0x4, offset = 0x4, fixed_abs, tag = 'smem constant byte address 0x4 - core index']
  #allocation1 [shape = 'u32[72,128]{1,0:T(1,128)}', space=vmem, size = 0x9000, scoped, tag = 'internal scratch']
  %s0 = inlined_call_operand.vmem [shape: s32[2,1,128], index: 0, kind: input, shape index: {}]
  %s1 = inlined_call_operand.vmem [shape: f32[2,3,128], index: 1, kind: input, shape index: {}]
  %s2 = inlined_call_operand.vmem [shape: f32[2,3,128], index: 2, kind: output, shape index: {}]
  %s3 = sld [smem:[#allocation0]]
  $region45: #{tpu_custom_call.1} parent=0
    _
  %s5 = ssub.s32 1, %s3
  %s6 = scalar_select 0, %s5, %s3
  loop: start=0, step=1, limit=4
  $region2: #{tpu_custom_call.1} parent=0 // loop_pre_header
    _
  $region3: #{tpu_custom_call.1} parent=0 // loop_header
    %s8 = sphi 0, %s12
    %p9 = scmp.ge.s32.totalorder %s8, 4
    %s15 = sphi 0, %s34
    %s16 = sphi 0, %s30
    %s17 = sphi 0, %s26
    %s18 = sphi 0, %s15
    %s19 = sphi 0, %s16
    %s20 = sphi 0, %s17
    %s21 = sphi 0, %s18
    %s22 = sphi 0, %s19
    %s23 = sphi 0, %s20
    %s39 = sphi 0, %s41
    %s42 = sphi 0, %s39
    %s43 = sphi 0, %s42
    %s59 = sphi 0, %s43
    %s67 = sphi 0, %s69
    %s70 = sphi 0, %s67
    %s71 = sphi 0, %s70
    %s87 = sphi 0, %s71
    %s95 = sphi 0, %s97
    %s98 = sphi 0, %s95
    %s99 = sphi 0, %s98
    %s115 = sphi 0, %s99
  $region4: #{tpu_custom_call.1} parent=0 // loop_header_branch
    %11 = sbr.rel (%p9) target = $region8
  $region5: #{tpu_custom_call.1} parent=0 // loop_body
    %s13 = ssub.s32 %s8, 1
    %s14 = ssub.s32 %s8, 2
    %s24 = sadd.s32 1, %s17
    %p25 = scmp.ge.s32.totalorder %s24, 1
    %s26 = scalar_select %p25, 0, %s24
    %s27 = sadd.s32 1, %s16
    %s28 = scalar_select %p25, %s27, %s16
    %p29 = scmp.ge.s32.totalorder %s28, 1
    %s30 = scalar_select %p29, 0, %s28
    %s31 = sadd.s32 1, %s15
    %s32 = scalar_select %p29, %s31, %s15
    %p33 = scmp.ge.s32.totalorder %s32, 2
    %s34 = scalar_select %p33, 0, %s32
    %s35 = ssub.s32 %s15, %s34
    %s36 = ssub.s32 %s16, %s30
    %s37 = sor.u32 %s35, %s36
    %p38 = scmp.eq.s32.totalorder %s37, 0
    %s40 = sadd.s32 %s39, 1
    %s41 = scalar_select %p38, %s39, %s40
    %p44 = pneg %p38
    %p45 = scmp.eq.s32.totalorder %s8, 1
    %p46 = por %p44, %p45
    %p47 = scmp.ne.s32.totalorder %s39, %s42
    %p48 = scmp.eq.s32.totalorder %s8, 0
    %p49 = por %p47, %p48
    %p50 = scmp.ne.s32.totalorder %s39, %s42
    %p51 = scmp.eq.s32.totalorder %s13, 1
    %p52 = por %p50, %p51
    %p53 = scmp.ne.s32.totalorder %s42, %s43
    %p54 = scmp.eq.s32.totalorder %s13, 0
    %p55 = por %p53, %p54
    %p56 = scmp.ne.s32.totalorder %s42, %s43
    %p57 = scmp.eq.s32.totalorder %s14, 1
    %p58 = por %p56, %p57
    %p60 = scmp.ne.s32.totalorder %s43, %s59
    %p61 = scmp.eq.s32.totalorder %s14, 0
    %p62 = por %p60, %p61
    %s63 = ssub.s32 %s15, %s34
    %s64 = ssub.s32 %s17, %s26
    %s65 = sor.u32 %s63, %s64
    %p66 = scmp.eq.s32.totalorder %s65, 0
    %s68 = sadd.s32 %s67, 1
    %s69 = scalar_select %p66, %s67, %s68
    %p72 = pneg %p66
    %p73 = scmp.eq.s32.totalorder %s8, 1
    %p74 = por %p72, %p73
    %p75 = scmp.ne.s32.totalorder %s67, %s70
    %p76 = scmp.eq.s32.totalorder %s8, 0
    %p77 = por %p75, %p76
    %p78 = scmp.ne.s32.totalorder %s67, %s70
    %p79 = scmp.eq.s32.totalorder %s13, 1
    %p80 = por %p78, %p79
    %p81 = scmp.ne.s32.totalorder %s70, %s71
    %p82 = scmp.eq.s32.totalorder %s13, 0
    %p83 = por %p81, %p82
    %p84 = scmp.ne.s32.totalorder %s70, %s71
    %p85 = scmp.eq.s32.totalorder %s14, 1
    %p86 = por %p84, %p85
    %p88 = scmp.ne.s32.totalorder %s71, %s87
    %p89 = scmp.eq.s32.totalorder %s14, 0
    %p90 = por %p88, %p89
    %s91 = ssub.s32 %s15, %s34
    %s92 = ssub.s32 %s16, %s30
    %s93 = sor.u32 %s91, %s92
    %p94 = scmp.eq.s32.totalorder %s93, 0
    %s96 = sadd.s32 %s95, 1
    %s97 = scalar_select %p94, %s95, %s96
    %p100 = pneg %p94
    %p101 = scmp.eq.s32.totalorder %s8, 1
    %p102 = por %p100, %p101
    %p103 = scmp.ne.s32.totalorder %s95, %s98
    %p104 = scmp.eq.s32.totalorder %s8, 0
    %p105 = por %p103, %p104
    %p106 = scmp.ne.s32.totalorder %s95, %s98
    %p107 = scmp.eq.s32.totalorder %s13, 1
    %p108 = por %p106, %p107
    %p109 = scmp.ne.s32.totalorder %s98, %s99
    %p110 = scmp.eq.s32.totalorder %s13, 0
    %p111 = por %p109, %p110
    %p112 = scmp.ne.s32.totalorder %s98, %s99
    %p113 = scmp.eq.s32.totalorder %s14, 1
    %p114 = por %p112, %p113
    %p116 = scmp.ne.s32.totalorder %s99, %s115
    %p117 = scmp.eq.s32.totalorder %s14, 0
    %p118 = por %p116, %p117
    %p119 = scmp.le.s32.totalorder 1, %s8
    %p120 = scmp.lt.s32.totalorder %s8, 3
    %p121 = pnand %p119, %p120
    %p122 = pneg %p121
    // Predicated region
    $region9: #{tpu_custom_call.1} parent=5 // pred_check
      _
    $region10: #{tpu_custom_call.1} parent=5 // pred_check_branch
      %124 = sbr.rel (%p121) target = $region12
    $region11: #{tpu_custom_call.1} parent=5 // pred_region
      %s125 = ssub.s32 %s8, 1
    $region12: #{tpu_custom_call.1} parent=5 // pred_fallthru
      _
    %p126 = scmp.lt.s32.totalorder %s8, 2
    // Predicated region
    $region13: #{tpu_custom_call.1} parent=5 // pred_check
      %p127 = pneg %p126
    $region14: #{tpu_custom_call.1} parent=5 // pred_check_branch
      %129 = sbr.rel (%p127) target = $region16
    $region15: #{tpu_custom_call.1} parent=5 // pred_region
      // Predicated region
      $region17: #{tpu_custom_call.1} parent=15 // pred_check
        %p130 = pneg %p49
      $region18: #{tpu_custom_call.1} parent=15 // pred_check_branch
        %132 = sbr.rel (%p130) target = $region20
      $region19: #{tpu_custom_call.1} parent=15 // pred_region
        %p133 = scmp.lt.s32.totalorder %s15, 1
        %s134 = scalar_select %p133, %s15, 1
        %p135 = scmp.lt.s32.totalorder %s16, 0
        %s136 = scalar_select %p135, %s16, 0
        %s137 = sadd.s32 %s136, %s134
        %s138 = scalar_lea.vmem %s0, %s137
      $region20: #{tpu_custom_call.1} parent=15 // pred_fallthru
        _
      // Predicated region
      $region21: #{tpu_custom_call.1} parent=15 // pred_check
        %p139 = pneg %p77
      $region22: #{tpu_custom_call.1} parent=15 // pred_check_branch
        %141 = sbr.rel (%p139) target = $region24
      $region23: #{tpu_custom_call.1} parent=15 // pred_region
        %p142 = scmp.lt.s32.totalorder %s15, 1
        %s143 = scalar_select %p142, %s15, 1
        %p144 = scmp.lt.s32.totalorder %s17, 0
        %s145 = scalar_select %p144, %s17, 0
        %s146 = sadd.s32 %s145, %s143
        %s147 = smul.addr %s146, 4
        %s148 = scalar_lea.vmem %s1, %s147
      $region24: #{tpu_custom_call.1} parent=15 // pred_fallthru
        _
    $region16: #{tpu_custom_call.1} parent=5 // pred_fallthru
      _
    %p149 = scmp.le.s32.totalorder 1, %s8
    %p150 = scmp.lt.s32.totalorder %s8, 3
    %p151 = pnand %p149, %p150
    %p152 = pneg %p151
    // Predicated region
    $region25: #{tpu_custom_call.1} parent=5 // pred_check
      _
    $region26: #{tpu_custom_call.1} parent=5 // pred_check_branch
      %154 = sbr.rel (%p151) target = $region28
    $region27: #{tpu_custom_call.1} parent=5 // pred_region
      %s155 = ssub.s32 %s8, 1
      %p156 = scmp.lt.s32.totalorder %s18, 1
      %s157 = scalar_select %p156, %s18, 1
      %p158 = scmp.lt.s32.totalorder %s19, 0
      %s159 = scalar_select %p158, %s19, 0
      %s160 = sadd.s32 %s159, %s157
      %s161 = scalar_lea.vmem %s0, %s160
      %p162 = pneg %p55
      %p163 = pneg %p52
      %p164 = scmp.lt.s32.totalorder %s18, 1
      %s165 = scalar_select %p164, %s18, 1
      %p166 = scmp.lt.s32.totalorder %s20, 0
      %s167 = scalar_select %p166, %s20, 0
      %s168 = sadd.s32 %s167, %s165
      %s169 = smul.addr %s168, 4
      %s170 = scalar_lea.vmem %s1, %s169
      %p171 = pneg %p83
      %p172 = pneg %p80
      %p173 = pneg %p111
      %p174 = pneg %p108
      %p175 = scmp.lt.s32.totalorder %s18, 1
      %s176 = scalar_select %p175, %s18, 1
      %p177 = scmp.lt.s32.totalorder %s19, 0
      %s178 = scalar_select %p177, %s19, 0
      %s179 = sadd.s32 %s178, %s176
      %s180 = smul.addr %s179, 4
      %s181 = scalar_lea.vmem %s2, %s180
      %p182 = scmp.lt.s32.totalorder %s18, 1
      %s183 = scalar_select %p182, %s18, 1
      %p184 = scmp.lt.s32.totalorder %s19, 0
      %s185 = scalar_select %p184, %s19, 0
      %s186 = sadd.s32 %s185, %s183
      %s187 = scalar_lea.vmem %s0, %s186
      %p188 = scmp.lt.s32.totalorder %s18, 1
      %s189 = scalar_select %p188, %s18, 1
      %p190 = scmp.lt.s32.totalorder %s20, 0
      %s191 = scalar_select %p190, %s20, 0
      %s192 = sadd.s32 %s191, %s189
      %s193 = smul.addr %s192, 4
      %s194 = scalar_lea.vmem %s1, %s193
      %p195 = scmp.lt.s32.totalorder %s18, 1
      %s196 = scalar_select %p195, %s18, 1
      %p197 = scmp.lt.s32.totalorder %s19, 0
      %s198 = scalar_select %p197, %s19, 0
      %s199 = sadd.s32 %s198, %s196
      %s200 = smul.addr %s199, 4
      %s201 = scalar_lea.vmem %s2, %s200
      %p202 = scmp.eq.s32.totalorder %s20, 0
      // Predicated region
      $region29: #{tpu_custom_call.1} parent=27 // pred_check
        %p203 = pneg %p202
      $region30: #{tpu_custom_call.1} parent=27 // pred_check_branch
        %205 = sbr.rel (%p203) target = $region32
      $region31: #{tpu_custom_call.1} parent=27 // pred_region
        %206 = vst [vmem:[%s201] sm:$0x7] 0.0
      $region32: #{tpu_custom_call.1} parent=27 // pred_fallthru
        _
      %s207 = smul.u32 %s20, 128
      %v208 = vlaneseq
      %v209 = vshrl.u32 %v208, 7
      %v210 = vadd.s32 %v209, 8
      %v211 = vadd.s32 %v209, 16
      %v212 = vadd.s32 %v209, 24
      %v213 = vadd.s32 %v209, 32
      %v214 = vadd.s32 %v209, 40
      %v215 = vadd.s32 %v209, 48
      %v216 = vadd.s32 %v209, 56
      %v217 = vadd.s32 %v209, 64
      %v218 = vadd.s32 %v209, 72
      %v219 = vadd.s32 %v209, 80
      %v220 = vadd.s32 %v209, 88
      %v221 = vadd.s32 %v209, 96
      %v222 = vadd.s32 %v209, 104
      %v223 = vadd.s32 %v209, 112
      %v224 = vadd.s32 %v209, 120
      %v225 = vstv %s207
      %v226 = vadd.s32 %v225, %v209
      %v227 = vadd.s32 %v225, %v210
      %v228 = vadd.s32 %v225, %v211
      %v229 = vadd.s32 %v225, %v212
      %v230 = vadd.s32 %v225, %v213
      %v231 = vadd.s32 %v225, %v214
      %v232 = vadd.s32 %v225, %v215
      %v233 = vadd.s32 %v225, %v216
      %v234 = vadd.s32 %v225, %v217
      %v235 = vadd.s32 %v225, %v218
      %v236 = vadd.s32 %v225, %v219
      %v237 = vadd.s32 %v225, %v220
      %v238 = vadd.s32 %v225, %v221
      %v239 = vadd.s32 %v225, %v222
      %v240 = vadd.s32 %v225, %v223
      %v241 = vadd.s32 %v225, %v224
      %v242 = vld [vmem:[%s187] sm:$0x1]
      %v243 = vperm.slane %v242, 0
      %vm244 = vcmp.eq.s32.totalorder %v226, %v243
      %vm245 = vcmp.eq.s32.totalorder %v227, %v243
      %vm246 = vcmp.eq.s32.totalorder %v228, %v243
      %vm247 = vcmp.eq.s32.totalorder %v229, %v243
      %vm248 = vcmp.eq.s32.totalorder %v230, %v243
      %vm249 = vcmp.eq.s32.totalorder %v231, %v243
      %vm250 = vcmp.eq.s32.totalorder %v232, %v243
      %vm251 = vcmp.eq.s32.totalorder %v233, %v243
      %vm252 = vcmp.eq.s32.totalorder %v234, %v243
      %vm253 = vcmp.eq.s32.totalorder %v235, %v243
      %vm254 = vcmp.eq.s32.totalorder %v236, %v243
      %vm255 = vcmp.eq.s32.totalorder %v237, %v243
      %vm256 = vcmp.eq.s32.totalorder %v238, %v243
      %vm257 = vcmp.eq.s32.totalorder %v239, %v243
      %vm258 = vcmp.eq.s32.totalorder %v240, %v243
      %vm259 = vcmp.eq.s32.totalorder %v241, %v243
      %v260 = vsel %vm244, 1, 0
      %v261 = vsel %vm245, 1, 0
      %v262 = vsel %vm246, 1, 0
      %v263 = vsel %vm247, 1, 0
      %v264 = vsel %vm248, 1, 0
      %v265 = vsel %vm249, 1, 0
      %v266 = vsel %vm250, 1, 0
      %v267 = vsel %vm251, 1, 0
      %v268 = vsel %vm252, 1, 0
      %v269 = vsel %vm253, 1, 0
      %v270 = vsel %vm254, 1, 0
      %v271 = vsel %vm255, 1, 0
      %v272 = vsel %vm256, 1, 0
      %v273 = vsel %vm257, 1, 0
      %v274 = vsel %vm258, 1, 0
      %v275 = vsel %vm259, 1, 0
      %v276 = vcvt.s32.f32 %v260
      %v277 = vcvt.s32.f32 %v261
      %v278 = vcvt.s32.f32 %v262
      %v279 = vcvt.s32.f32 %v263
      %v280 = vcvt.s32.f32 %v264
      %v281 = vcvt.s32.f32 %v265
      %v282 = vcvt.s32.f32 %v266
      %v283 = vcvt.s32.f32 %v267
      %v284 = vcvt.s32.f32 %v268
      %v285 = vcvt.s32.f32 %v269
      %v286 = vcvt.s32.f32 %v270
      %v287 = vcvt.s32.f32 %v271
      %v288 = vcvt.s32.f32 %v272
      %v289 = vcvt.s32.f32 %v273
      %v290 = vcvt.s32.f32 %v274
      %v291 = vcvt.s32.f32 %v275
      %v292 = vld [vmem:[%s201] sm:$0x7]
      %v293 = vld [vmem:[%s194] sm:$0x7]
      %v294 = vand.u32 %v291, 4294901760
      %295 = vmatpush.msra.mxu0 %v294
      %v296 = vand.u32 %v290, 4294901760
      %297 = vmatpush.msra.mxu0 %v296
      %v298 = vand.u32 %v289, 4294901760
      %299 = vmatpush.msra.mxu0 %v298
      %v300 = vand.u32 %v288, 4294901760
      %301 = vmatpush.msra.mxu0 %v300
      %v302 = vand.u32 %v287, 4294901760
      %303 = vmatpush.msra.mxu0 %v302
      %v304 = vand.u32 %v286, 4294901760
      %305 = vmatpush.msra.mxu0 %v304
      %v306 = vand.u32 %v285, 4294901760
      %307 = vmatpush.msra.mxu0 %v306
      %v308 = vand.u32 %v284, 4294901760
      %309 = vmatpush.msra.mxu0 %v308
      %v310 = vand.u32 %v283, 4294901760
      %311 = vmatpush.msra.mxu0 %v310
      %v312 = vand.u32 %v282, 4294901760
      %313 = vmatpush.msra.mxu0 %v312
      %v314 = vand.u32 %v281, 4294901760
      %315 = vmatpush.msra.mxu0 %v314
      %v316 = vand.u32 %v280, 4294901760
      %317 = vmatpush.msra.mxu0 %v316
      %v318 = vand.u32 %v279, 4294901760
      %319 = vmatpush.msra.mxu0 %v318
      %v320 = vand.u32 %v278, 4294901760
      %321 = vmatpush.msra.mxu0 %v320
      %v322 = vand.u32 %v277, 4294901760
      %323 = vmatpush.msra.mxu0 %v322
      %v324 = vand.u32 %v276, 4294901760
      %325 = vmatpush.msra.mxu0 %v324
      %v326 = vand.u32 %v293, 4294901760
      %v327 = vsub.f32 %v293, %v326
      %v328 = vand.u32 %v327, 4294901760
      %v329 = vsub.f32 %v327, %v328
      %v330 = vand.u32 %v329, 4294901760
      %331 = vmatmul.f32.gmra.mxu0 %v330
      %v332 = vpop.f32.mrf.mxu0
      %v333 = vadd.f32 0.0, %v332
      %334 = vdwg.mxu0
      %v335 = vand.u32 %v291, 4294901760
      %v336 = vsub.f32 %v291, %v335
      %v337 = vand.u32 %v336, 4294901760
      %v338 = vsub.f32 %v336, %v337
      %v339 = vand.u32 %v338, 4294901760
      %340 = vmatpush.msra.mxu0 %v339
      %v341 = vand.u32 %v290, 4294901760
      %v342 = vsub.f32 %v290, %v341
      %v343 = vand.u32 %v342, 4294901760
      %v344 = vsub.f32 %v342, %v343
      %v345 = vand.u32 %v344, 4294901760
      %346 = vmatpush.msra.mxu0 %v345
      %v347 = vand.u32 %v289, 4294901760
      %v348 = vsub.f32 %v289, %v347
      %v349 = vand.u32 %v348, 4294901760
      %v350 = vsub.f32 %v348, %v349
      %v351 = vand.u32 %v350, 4294901760
      %352 = vmatpush.msra.mxu0 %v351
      %v353 = vand.u32 %v288, 4294901760
      %v354 = vsub.f32 %v288, %v353
      %v355 = vand.u32 %v354, 4294901760
      %v356 = vsub.f32 %v354, %v355
      %v357 = vand.u32 %v356, 4294901760
      %358 = vmatpush.msra.mxu0 %v357
      %v359 = vand.u32 %v287, 4294901760
      %v360 = vsub.f32 %v287, %v359
      %v361 = vand.u32 %v360, 4294901760
      %v362 = vsub.f32 %v360, %v361
      %v363 = vand.u32 %v362, 4294901760
      %364 = vmatpush.msra.mxu0 %v363
      %v365 = vand.u32 %v286, 4294901760
      %v366 = vsub.f32 %v286, %v365
      %v367 = vand.u32 %v366, 4294901760
      %v368 = vsub.f32 %v366, %v367
      %v369 = vand.u32 %v368, 4294901760
      %370 = vmatpush.msra.mxu0 %v369
      %v371 = vand.u32 %v285, 4294901760
      %v372 = vsub.f32 %v285, %v371
      %v373 = vand.u32 %v372, 4294901760
      %v374 = vsub.f32 %v372, %v373
      %v375 = vand.u32 %v374, 4294901760
      %376 = vmatpush.msra.mxu0 %v375
      %v377 = vand.u32 %v284, 4294901760
      %v378 = vsub.f32 %v284, %v377
      %v379 = vand.u32 %v378, 4294901760
      %v380 = vsub.f32 %v378, %v379
      %v381 = vand.u32 %v380, 4294901760
      %382 = vmatpush.msra.mxu0 %v381
      %v383 = vand.u32 %v283, 4294901760
      %v384 = vsub.f32 %v283, %v383
      %v385 = vand.u32 %v384, 4294901760
      %v386 = vsub.f32 %v384, %v385
      %v387 = vand.u32 %v386, 4294901760
      %388 = vmatpush.msra.mxu0 %v387
      %v389 = vand.u32 %v282, 4294901760
      %v390 = vsub.f32 %v282, %v389
      %v391 = vand.u32 %v390, 4294901760
      %v392 = vsub.f32 %v390, %v391
      %v393 = vand.u32 %v392, 4294901760
      %394 = vmatpush.msra.mxu0 %v393
      %v395 = vand.u32 %v281, 4294901760
      %v396 = vsub.f32 %v281, %v395
      %v397 = vand.u32 %v396, 4294901760
      %v398 = vsub.f32 %v396, %v397
      %v399 = vand.u32 %v398, 4294901760
      %400 = vmatpush.msra.mxu0 %v399
      %v401 = vand.u32 %v280, 4294901760
      %v402 = vsub.f32 %v280, %v401
      %v403 = vand.u32 %v402, 4294901760
      %v404 = vsub.f32 %v402, %v403
      %v405 = vand.u32 %v404, 4294901760
      %406 = vmatpush.msra.mxu0 %v405
      %v407 = vand.u32 %v279, 4294901760
      %v408 = vsub.f32 %v279, %v407
      %v409 = vand.u32 %v408, 4294901760
      %v410 = vsub.f32 %v408, %v409
      %v411 = vand.u32 %v410, 4294901760
      %412 = vmatpush.msra.mxu0 %v411
      %v413 = vand.u32 %v278, 4294901760
      %v414 = vsub.f32 %v278, %v413
      %v415 = vand.u32 %v414, 4294901760
      %v416 = vsub.f32 %v414, %v415
      %v417 = vand.u32 %v416, 4294901760
      %418 = vmatpush.msra.mxu0 %v417
      %v419 = vand.u32 %v277, 4294901760
      %v420 = vsub.f32 %v277, %v419
      %v421 = vand.u32 %v420, 4294901760
      %v422 = vsub.f32 %v420, %v421
      %v423 = vand.u32 %v422, 4294901760
      %424 = vmatpush.msra.mxu0 %v423
      %v425 = vand.u32 %v276, 4294901760
      %v426 = vsub.f32 %v276, %v425
      %v427 = vand.u32 %v426, 4294901760
      %v428 = vsub.f32 %v426, %v427
      %v429 = vand.u32 %v428, 4294901760
      %430 = vmatpush.msra.mxu0 %v429
      %v431 = vand.u32 %v293, 4294901760
      %432 = vmatmul.f32.gmra.mxu0 %v431
      %v433 = vpop.f32.mrf.mxu0
      %v434 = vadd.f32 %v333, %v433
      %435 = vdwg.mxu0
      %v436 = vand.u32 %v291, 4294901760
      %v437 = vsub.f32 %v291, %v436
      %438 = vmatpush.msra.mxu0 %v437
      %v439 = vand.u32 %v290, 4294901760
      %v440 = vsub.f32 %v290, %v439
      %441 = vmatpush.msra.mxu0 %v440
      %v442 = vand.u32 %v289, 4294901760
      %v443 = vsub.f32 %v289, %v442
      %444 = vmatpush.msra.mxu0 %v443
      %v445 = vand.u32 %v288, 4294901760
      %v446 = vsub.f32 %v288, %v445
      %447 = vmatpush.msra.mxu0 %v446
      %v448 = vand.u32 %v287, 4294901760
      %v449 = vsub.f32 %v287, %v448
      %450 = vmatpush.msra.mxu0 %v449
      %v451 = vand.u32 %v286, 4294901760
      %v452 = vsub.f32 %v286, %v451
      %453 = vmatpush.msra.mxu0 %v452
      %v454 = vand.u32 %v285, 4294901760
      %v455 = vsub.f32 %v285, %v454
      %456 = vmatpush.msra.mxu0 %v455
      %v457 = vand.u32 %v284, 4294901760
      %v458 = vsub.f32 %v284, %v457
      %459 = vmatpush.msra.mxu0 %v458
      %v460 = vand.u32 %v283, 4294901760
      %v461 = vsub.f32 %v283, %v460
      %462 = vmatpush.msra.mxu0 %v461
      %v463 = vand.u32 %v282, 4294901760
      %v464 = vsub.f32 %v282, %v463
      %465 = vmatpush.msra.mxu0 %v464
      %v466 = vand.u32 %v281, 4294901760
      %v467 = vsub.f32 %v281, %v466
      %468 = vmatpush.msra.mxu0 %v467
      %v469 = vand.u32 %v280, 4294901760
      %v470 = vsub.f32 %v280, %v469
      %471 = vmatpush.msra.mxu0 %v470
      %v472 = vand.u32 %v279, 4294901760
      %v473 = vsub.f32 %v279, %v472
      %474 = vmatpush.msra.mxu0 %v473
      %v475 = vand.u32 %v278, 4294901760
      %v476 = vsub.f32 %v278, %v475
      %477 = vmatpush.msra.mxu0 %v476
      %v478 = vand.u32 %v277, 4294901760
      %v479 = vsub.f32 %v277, %v478
      %480 = vmatpush.msra.mxu0 %v479
      %v481 = vand.u32 %v276, 4294901760
      %v482 = vsub.f32 %v276, %v481
      %483 = vmatpush.msra.mxu0 %v482
      %v484 = vand.u32 %v293, 4294901760
      %v485 = vsub.f32 %v293, %v484
      %486 = vmatmul.f32.gmra.mxu0 %v485
      %v487 = vpop.f32.mrf.mxu0
      %v488 = vadd.f32 %v434, %v487
      %489 = vdwg.mxu0
      %v490 = vand.u32 %v291, 4294901760
      %491 = vmatpush.msra.mxu0 %v490
      %v492 = vand.u32 %v290, 4294901760
      %493 = vmatpush.msra.mxu0 %v492
      %v494 = vand.u32 %v289, 4294901760
      %495 = vmatpush.msra.mxu0 %v494
      %v496 = vand.u32 %v288, 4294901760
      %497 = vmatpush.msra.mxu0 %v496
      %v498 = vand.u32 %v287, 4294901760
      %499 = vmatpush.msra.mxu0 %v498
      %v500 = vand.u32 %v286, 4294901760
      %501 = vmatpush.msra.mxu0 %v500
      %v502 = vand.u32 %v285, 4294901760
      %503 = vmatpush.msra.mxu0 %v502
      %v504 = vand.u32 %v284, 4294901760
      %505 = vmatpush.msra.mxu0 %v504
      %v506 = vand.u32 %v283, 4294901760
      %507 = vmatpush.msra.mxu0 %v506
      %v508 = vand.u32 %v282, 4294901760
      %509 = vmatpush.msra.mxu0 %v508
      %v510 = vand.u32 %v281, 4294901760
      %511 = vmatpush.msra.mxu0 %v510
      %v512 = vand.u32 %v280, 4294901760
      %513 = vmatpush.msra.mxu0 %v512
      %v514 = vand.u32 %v279, 4294901760
      %515 = vmatpush.msra.mxu0 %v514
      %v516 = vand.u32 %v278, 4294901760
      %517 = vmatpush.msra.mxu0 %v516
      %v518 = vand.u32 %v277, 4294901760
      %519 = vmatpush.msra.mxu0 %v518
      %v520 = vand.u32 %v276, 4294901760
      %521 = vmatpush.msra.mxu0 %v520
      %v522 = vand.u32 %v293, 4294901760
      %v523 = vsub.f32 %v293, %v522
      %v524 = vand.u32 %v523, 4294901760
      %525 = vmatmul.f32.gmra.mxu0 %v524
      %v526 = vpop.f32.mrf.mxu0
      %v527 = vadd.f32 %v488, %v526
      %528 = vdwg.mxu0
      %v529 = vand.u32 %v291, 4294901760
      %v530 = vsub.f32 %v291, %v529
      %v531 = vand.u32 %v530, 4294901760
      %532 = vmatpush.msra.mxu0 %v531
      %v533 = vand.u32 %v290, 4294901760
      %v534 = vsub.f32 %v290, %v533
      %v535 = vand.u32 %v534, 4294901760
      %536 = vmatpush.msra.mxu0 %v535
      %v537 = vand.u32 %v289, 4294901760
      %v538 = vsub.f32 %v289, %v537
      %v539 = vand.u32 %v538, 4294901760
      %540 = vmatpush.msra.mxu0 %v539
      %v541 = vand.u32 %v288, 4294901760
      %v542 = vsub.f32 %v288, %v541
      %v543 = vand.u32 %v542, 4294901760
      %544 = vmatpush.msra.mxu0 %v543
      %v545 = vand.u32 %v287, 4294901760
      %v546 = vsub.f32 %v287, %v545
      %v547 = vand.u32 %v546, 4294901760
      %548 = vmatpush.msra.mxu0 %v547
      %v549 = vand.u32 %v286, 4294901760
      %v550 = vsub.f32 %v286, %v549
      %v551 = vand.u32 %v550, 4294901760
      %552 = vmatpush.msra.mxu0 %v551
      %v553 = vand.u32 %v285, 4294901760
      %v554 = vsub.f32 %v285, %v553
      %v555 = vand.u32 %v554, 4294901760
      %556 = vmatpush.msra.mxu0 %v555
      %v557 = vand.u32 %v284, 4294901760
      %v558 = vsub.f32 %v284, %v557
      %v559 = vand.u32 %v558, 4294901760
      %560 = vmatpush.msra.mxu0 %v559
      %v561 = vand.u32 %v283, 4294901760
      %v562 = vsub.f32 %v283, %v561
      %v563 = vand.u32 %v562, 4294901760
      %564 = vmatpush.msra.mxu0 %v563
      %v565 = vand.u32 %v282, 4294901760
      %v566 = vsub.f32 %v282, %v565
      %v567 = vand.u32 %v566, 4294901760
      %568 = vmatpush.msra.mxu0 %v567
      %v569 = vand.u32 %v281, 4294901760
      %v570 = vsub.f32 %v281, %v569
      %v571 = vand.u32 %v570, 4294901760
      %572 = vmatpush.msra.mxu0 %v571
      %v573 = vand.u32 %v280, 4294901760
      %v574 = vsub.f32 %v280, %v573
      %v575 = vand.u32 %v574, 4294901760
      %576 = vmatpush.msra.mxu0 %v575
      %v577 = vand.u32 %v279, 4294901760
      %v578 = vsub.f32 %v279, %v577
      %v579 = vand.u32 %v578, 4294901760
      %580 = vmatpush.msra.mxu0 %v579
      %v581 = vand.u32 %v278, 4294901760
      %v582 = vsub.f32 %v278, %v581
      %v583 = vand.u32 %v582, 4294901760
      %584 = vmatpush.msra.mxu0 %v583
      %v585 = vand.u32 %v277, 4294901760
      %v586 = vsub.f32 %v277, %v585
      %v587 = vand.u32 %v586, 4294901760
      %588 = vmatpush.msra.mxu0 %v587
      %v589 = vand.u32 %v276, 4294901760
      %v590 = vsub.f32 %v276, %v589
      %v591 = vand.u32 %v590, 4294901760
      %592 = vmatpush.msra.mxu0 %v591
      %v593 = vand.u32 %v293, 4294901760
      %594 = vmatmul.f32.gmra.mxu0 %v593
      %v595 = vpop.f32.mrf.mxu0
      %v596 = vadd.f32 %v527, %v595
      %597 = vdwg.mxu0
      %v598 = vand.u32 %v291, 4294901760
      %599 = vmatpush.msra.mxu0 %v598
      %v600 = vand.u32 %v290, 4294901760
      %601 = vmatpush.msra.mxu0 %v600
      %v602 = vand.u32 %v289, 4294901760
      %603 = vmatpush.msra.mxu0 %v602
      %v604 = vand.u32 %v288, 4294901760
      %605 = vmatpush.msra.mxu0 %v604
      %v606 = vand.u32 %v287, 4294901760
      %607 = vmatpush.msra.mxu0 %v606
      %v608 = vand.u32 %v286, 4294901760
      %609 = vmatpush.msra.mxu0 %v608
      %v610 = vand.u32 %v285, 4294901760
      %611 = vmatpush.msra.mxu0 %v610
      %v612 = vand.u32 %v284, 4294901760
      %613 = vmatpush.msra.mxu0 %v612
      %v614 = vand.u32 %v283, 4294901760
      %615 = vmatpush.msra.mxu0 %v614
      %v616 = vand.u32 %v282, 4294901760
      %617 = vmatpush.msra.mxu0 %v616
      %v618 = vand.u32 %v281, 4294901760
      %619 = vmatpush.msra.mxu0 %v618
      %v620 = vand.u32 %v280, 4294901760
      %621 = vmatpush.msra.mxu0 %v620
      %v622 = vand.u32 %v279, 4294901760
      %623 = vmatpush.msra.mxu0 %v622
      %v624 = vand.u32 %v278, 4294901760
      %625 = vmatpush.msra.mxu0 %v624
      %v626 = vand.u32 %v277, 4294901760
      %627 = vmatpush.msra.mxu0 %v626
      %v628 = vand.u32 %v276, 4294901760
      %629 = vmatpush.msra.mxu0 %v628
      %v630 = vand.u32 %v293, 4294901760
      %631 = vmatmul.f32.gmra.mxu0 %v630
      %v632 = vpop.f32.mrf.mxu0
      %v633 = vadd.f32 %v596, %v632
      %634 = vdwg.mxu0
      %v635 = vadd.f32 %v292, %v633
      %636 = vst [vmem:[%s201] sm:$0x7] %v635
      %p637 = scmp.lt.s32.totalorder %s18, 1
      %s638 = scalar_select %p637, %s18, 1
      %p639 = scmp.lt.s32.totalorder %s19, 0
      %s640 = scalar_select %p639, %s19, 0
      %s641 = sadd.s32 %s640, %s638
      %s642 = smul.addr %s641, 4
      %s643 = scalar_lea.vmem %s2, %s642
      // Predicated region
      $region33: #{tpu_custom_call.1} parent=27 // pred_check
        %p644 = pneg %p108
      $region34: #{tpu_custom_call.1} parent=27 // pred_check_branch
        %646 = sbr.rel (%p644) target = $region36
      $region35: #{tpu_custom_call.1} parent=27 // pred_region
        _
      $region36: #{tpu_custom_call.1} parent=27 // pred_fallthru
        _
    $region28: #{tpu_custom_call.1} parent=5 // pred_fallthru
      _
    %p647 = scmp.le.s32.totalorder 2, %s8
    // Predicated region
    $region37: #{tpu_custom_call.1} parent=5 // pred_check
      %p648 = pneg %p647
    $region38: #{tpu_custom_call.1} parent=5 // pred_check_branch
      %650 = sbr.rel (%p648) target = $region40
    $region39: #{tpu_custom_call.1} parent=5 // pred_region
      %s651 = ssub.s32 %s8, 2
      // Predicated region
      $region41: #{tpu_custom_call.1} parent=39 // pred_check
        %p652 = pneg %p114
      $region42: #{tpu_custom_call.1} parent=39 // pred_check_branch
        %654 = sbr.rel (%p652) target = $region44
      $region43: #{tpu_custom_call.1} parent=39 // pred_region
        %p655 = scmp.lt.s32.totalorder %s21, 1
        %s656 = scalar_select %p655, %s21, 1
        %p657 = scmp.lt.s32.totalorder %s22, 0
        %s658 = scalar_select %p657, %s22, 0
        %s659 = sadd.s32 %s658, %s656
        %s660 = smul.addr %s659, 4
        %s661 = scalar_lea.vmem %s2, %s660
      $region44: #{tpu_custom_call.1} parent=39 // pred_fallthru
        _
    $region40: #{tpu_custom_call.1} parent=5 // pred_fallthru
      _
  $region6: #{tpu_custom_call.1} parent=0 // loop_footer
    %s12 = sadd.s32 1, %s8
  $region7: #{tpu_custom_call.1} parent=0 // loop_footer_branch
    %7 = sbr.rel target = $region3
  $region8: #{tpu_custom_call.1} parent=0 // loop_exit
    _

</llo_original>
